<compile_context>
chip_gen: v7x
topology: tpu7x:2x2x1
jax: 0.10.0
libtpu: 0.0.40
codegen_flags: <defaults>
</compile_context>

<pallas_src>
import functools

import jax
import jax.numpy as jnp
from jax.experimental import pallas as pl
from jax.experimental.pallas import tpu as pltpu

_LANE = 128        # lane width (last dim tiling)
_SUBLANE = 8       # sublane width (second-to-last dim tiling)
_MIN_SPLIT_ROWS = 256   # only force >=2 batch tiles (v7x megacore) above this


def _round_up(n: int, m: int) -> int:
    return ((n + m - 1) // m) * m


def _fused_mlp_kernel(x_ref, *refs, activations, mm_dtype):
    """Fused MLP on one batch tile.

    refs layout: (w0, b0, w1, b1, ..., w_{L-1}, b_{L-1}, o_ref)
      x_ref : [TILE_B, Din]              (raw, unpadded feature width)
      w_l   : [Din_l, Dout_pad_l]        (pre-transposed, lane-padded out dim)
      b_l   : [1, Dout_pad_l]            (f32)
      o_ref : [TILE_B, Dout_pad_last]
    """
    n_layers = len(activations)
    o_ref = refs[2 * n_layers]
    h = x_ref[...]
    for li, act in enumerate(activations):
        w = refs[2 * li][...]
        b = refs[2 * li + 1][...]
        # Matmul inputs in mm_dtype (f32 or bf16), f32 accumulation on MXU;
        # bias add + activation always in f32 (no bf16 VPU/EUP needed on v5e).
        z = jnp.dot(h.astype(mm_dtype), w,
                    preferred_element_type=jnp.float32) + b
        if act == "leaky_relu":
            # nn.LeakyReLU default negative_slope = 0.01
            h = jnp.maximum(z, 0.01 * z)
        else:
            h = jnp.tanh(z)  # EUP
    o_ref[...] = h.astype(o_ref.dtype)


_BUFFERED = getattr(pl, "Buffered", None)


def _const_block_spec(shape):
    """BlockSpec for a weight/bias that is identical for every grid step.

    Buffered(1): a block whose index never changes does not need
    double-buffering; halves its VMEM footprint (important on v7x's 64 MiB).
    """
    if _BUFFERED is not None:
        try:
            return pl.BlockSpec(shape, lambda i: (0, 0),
                                pipeline_mode=_BUFFERED(1))
        except TypeError:
            pass  # older jax without pipeline_mode kwarg
    return pl.BlockSpec(shape, lambda i: (0, 0))


class SpectralNetModelPallas:
    """JAX/Pallas re-implementation of SpectralNetModel's forward pass."""

    def __init__(self, architecture: dict, input_dim: int, key,
                 tile_b: int = 1024, matmul_dtype=jnp.float32):
        self.architecture = architecture
        self.input_dim = input_dim
        self.tile_b_max = tile_b
        self.matmul_dtype = matmul_dtype
        # Streaming x in the matmul dtype halves x HBM bytes on the bf16 path.
        self.x_dtype = matmul_dtype

        self.params = []          # unpadded (W [out,in], b [out], act) f32 reference
        self.weights_padded = []  # pre-transposed [Din_l, Dout_pad_l], mm dtype
        self.biases_padded = []   # [1, Dout_pad_l], f32
        self.activations = []

        current_dim = input_dim
        prev_actual = None   # actual feature width of h entering next layer
        prev_pad = None      # padded feature width of h entering next layer
        for layer_name, dim in architecture.items():
            if layer_name == "n_layers":
                continue
            next_dim = dim
            act = "tanh" if layer_name == "output_dim" else "leaky_relu"
            key, kw, kb = jax.random.split(key, 3)
            # Deterministic PyTorch-like init: U(-1/sqrt(fan_in), 1/sqrt(fan_in))
            bound = 1.0 / (current_dim ** 0.5)
            W = jax.random.uniform(
                kw, (next_dim, current_dim), jnp.float32, -bound, bound)
            bvec = jax.random.uniform(
                kb, (next_dim,), jnp.float32, -bound, bound)
            self.params.append((W, bvec, act))
            self.activations.append(act)

            if prev_actual is None:
                # First layer: keep K equal to the raw input width so x can be
                # streamed without host-side lane padding (Mosaic pads K
                # internally for the matmul).
                din_store = current_dim
            else:
                if current_dim != prev_actual:
                    # Mirrors the PyTorch quirk (current_dim not advanced after
                    # 'output_dim'); PyTorch would fail at forward time with a
                    # shape error — fail loudly at init instead.
                    raise ValueError(
                        "layer input width does not match running feature "
                        "width ('output_dim' must be the last entry unless "
                        "dims happen to match)")
                din_store = prev_pad
            dout_pad = _round_up(next_dim, _LANE)

            Wt = jnp.zeros((din_store, dout_pad), jnp.float32)
            Wt = Wt.at[:current_dim, :next_dim].set(W.T)
            self.weights_padded.append(Wt.astype(matmul_dtype))
            bp = jnp.zeros((1, dout_pad), jnp.float32)
            bp = bp.at[0, :next_dim].set(bvec)
            self.biases_padded.append(bp)

            prev_actual = next_dim
            prev_pad = dout_pad
            if layer_name != "output_dim":
                # Mirrors PyTorch: current_dim not updated after 'output_dim'.
                current_dim = next_dim

        self.out_dim = prev_actual
        self.dout_last_pad = prev_pad
        self.activations = tuple(self.activations)

    def __call__(self, x, is_orthonorm: bool = True, crop_features: bool = True):
        B, Din = x.shape
        assert Din == self.input_dim

        # --- batch tiling -----------------------------------------------
        # Minimize last-tile waste: tile_b = round_up(cdiv(B, n_tiles), 8).
        # For large batches force >=2 tiles so both v7x TensorCores get work
        # on the "parallel" axis (harmless 0.35us/step cost on v5e/v6e).
        num_tiles = max(1, pl.cdiv(B, self.tile_b_max))
        if num_tiles == 1 and B >= _MIN_SPLIT_ROWS:
            num_tiles = 2
        tile_b = _round_up(pl.cdiv(B, num_tiles), _SUBLANE)
        num_tiles = pl.cdiv(B, tile_b)
        b_pad = num_tiles * tile_b

        # Only the batch dim is padded; the feature dim is streamed raw
        # (last block dim == full array dim is always a legal BlockSpec).
        x_in = x.astype(self.x_dtype)
        if b_pad != B:
            x_in = jnp.pad(x_in, ((0, b_pad - B), (0, 0)))

        kernel = functools.partial(_fused_mlp_kernel,
                                   activations=self.activations,
                                   mm_dtype=self.matmul_dtype)

        in_specs = [pl.BlockSpec((tile_b, Din), lambda i: (i, 0))]
        operands = [x_in]
        for W, bvec in zip(self.weights_padded, self.biases_padded):
            in_specs.append(_const_block_spec(W.shape))
            in_specs.append(_const_block_spec(bvec.shape))
            operands.append(W)
            operands.append(bvec)

        # --- VMEM budget --------------------------------------------------
        # weights x1 (single-buffered) + streamed x/out tiles x2 (double-
        # buffered) + two live intermediate activations + headroom, capped at
        # 56 MiB so compiler scratch still fits on v7x's 64 MiB/TC.
        param_bytes = sum(int(W.size) * W.dtype.itemsize
                          for W in self.weights_padded)
        param_bytes += sum(int(b.size) * 4 for b in self.biases_padded)
        max_dout_pad = max(W.shape[1] for W in self.weights_padded)
        stream_bytes = 2 * tile_b * (
            Din * jnp.dtype(self.x_dtype).itemsize + self.dout_last_pad * 4)
        interm_bytes = 2 * tile_b * max_dout_pad * 4
        vmem_est = param_bytes + stream_bytes + interm_bytes + (4 << 20)
        vmem_limit = int(min(max(vmem_est, 16 << 20), 56 << 20))

        out_pad = pl.pallas_call(
            kernel,
            out_shape=jax.ShapeDtypeStruct((b_pad, self.dout_last_pad),
                                           jnp.float32),
            grid=(num_tiles,),
            in_specs=in_specs,
            out_specs=pl.BlockSpec((tile_b, self.dout_last_pad),
                                   lambda i: (i, 0)),
            compiler_params=pltpu.CompilerParams(
                dimension_semantics=("parallel",),
                vmem_limit_bytes=vmem_limit,
            ),
        )(*operands)

        out = out_pad
        if b_pad != B:
            out = out[:B]
        if crop_features:
            # Materializes a narrow copy; pass crop_features=False to keep the
            # lane-dense padded slab for downstream consumers instead.
            out = out[:, :self.out_dim]
        return out


def _reference_forward(model, x):
    """Pure-jnp f32 reference (unpadded params) for correctness checking."""
    for W, bvec, act in model.params:
        x = x @ W.T + bvec
        if act == "leaky_relu":
            x = jnp.where(x >= 0, x, 0.01 * x)
        else:
            x = jnp.tanh(x)
    return x


# TODO(synk): _make_orthonorm_weights (QR + inverse) is not called in
# forward(), so it is intentionally not implemented as a Pallas kernel.


if __name__ == "__main__":
    key = jax.random.PRNGKey(0)
    key, k_in, k_model = jax.random.split(key, 3)

    # Small shapes consistent with the module: batch=8, input_dim=16,
    # two hidden layers of 32, output_dim=8.
    architecture = {
        "n_layers": 3,
        "hidden_dim1": 32,
        "hidden_dim2": 32,
        "output_dim": 8,
    }
    input_dim = 16
    batch = 8

    x = jax.random.normal(k_in, (batch, input_dim), jnp.float32)

    # f32 path (matches PyTorch numerics).
    model = SpectralNetModelPallas(architecture, input_dim, k_model)
    out = jax.block_until_ready(model(x))

    ref = _reference_forward(model, x)
    assert out.shape == (batch, architecture["output_dim"])
    assert jnp.allclose(out, ref, atol=2e-5, rtol=2e-5), "f32 mismatch vs reference"

    # Optional bf16-matmul path (recommended on v6e/v7x; also fine on v5e
    # since only the dot inputs are bf16, elementwise stays f32).
    model_bf16 = SpectralNetModelPallas(architecture, input_dim, k_model,
                                        matmul_dtype=jnp.bfloat16)
    out_bf16 = jax.block_until_ready(model_bf16(x))
    assert out_bf16.shape == (batch, architecture["output_dim"])
    assert bool(jnp.all(jnp.isfinite(out_bf16)))
    assert jnp.allclose(out_bf16, ref, atol=1e-1, rtol=1e-1), "bf16 path far off"

    print("KERNEL_OK")
</pallas_src>

<mosaic_0001>
module attributes {stable_mosaic.version = 11 : i64} {
  func.func @_fused_mlp_kernel(%arg0: i32, %arg1: memref<8x16xf32, #tpu.memory_space<vmem>>, %arg2: memref<16x128xf32, #tpu.memory_space<vmem>>, %arg3: memref<1x128xf32, #tpu.memory_space<vmem>>, %arg4: memref<128x128xf32, #tpu.memory_space<vmem>>, %arg5: memref<1x128xf32, #tpu.memory_space<vmem>>, %arg6: memref<128x128xf32, #tpu.memory_space<vmem>>, %arg7: memref<1x128xf32, #tpu.memory_space<vmem>>, %arg8: memref<8x128xf32, #tpu.memory_space<vmem>>) attributes {dimension_semantics = [#tpu.dimension_semantics<parallel>], iteration_bounds = array<i64: 1>, scalar_prefetch = 0 : i64, scratch_operands = 0 : i64, tpu.core_type = #tpu.core_type<tc>, window_params = [{transform_indices = @transform_0, window_bounds = array<i64: 8, 16>}, {pipeline_mode = #tpu.pipeline_mode<synchronous>, transform_indices = @transform_1, window_bounds = array<i64: 16, 128>}, {pipeline_mode = #tpu.pipeline_mode<synchronous>, transform_indices = @transform_2, window_bounds = array<i64: 1, 128>}, {pipeline_mode = #tpu.pipeline_mode<synchronous>, transform_indices = @transform_3, window_bounds = array<i64: 128, 128>}, {pipeline_mode = #tpu.pipeline_mode<synchronous>, transform_indices = @transform_4, window_bounds = array<i64: 1, 128>}, {pipeline_mode = #tpu.pipeline_mode<synchronous>, transform_indices = @transform_5, window_bounds = array<i64: 128, 128>}, {pipeline_mode = #tpu.pipeline_mode<synchronous>, transform_indices = @transform_6, window_bounds = array<i64: 1, 128>}, {transform_indices = @transform_7, window_bounds = array<i64: 8, 128>}]} {
    %c0 = arith.constant 0 : index
    %c0_0 = arith.constant 0 : index
    %0 = vector.load %arg1[%c0, %c0_0] : memref<8x16xf32, #tpu.memory_space<vmem>>, vector<8x16xf32>
    %c0_1 = arith.constant 0 : index
    %c0_2 = arith.constant 0 : index
    %1 = vector.load %arg2[%c0_1, %c0_2] : memref<16x128xf32, #tpu.memory_space<vmem>>, vector<16x128xf32>
    %c0_3 = arith.constant 0 : index
    %c0_4 = arith.constant 0 : index
    %2 = vector.load %arg3[%c0_3, %c0_4] : memref<1x128xf32, #tpu.memory_space<vmem>>, vector<1x128xf32>
    %cst = arith.constant dense<0.000000e+00> : vector<8x128xf32>
    %3 = tpu.matmul %0, %1, %cst {dimension_numbers = #tpu.dot_dimension_numbers<[1], [0], [0], [1], [0, 0, 1, 1], [], []>} : vector<8x16xf32>, vector<16x128xf32>, vector<8x128xf32> -> vector<8x128xf32>
    %4 = vector.broadcast %2 : vector<1x128xf32> to vector<8x128xf32>
    %5 = arith.addf %3, %4 : vector<8x128xf32>
    %cst_5 = arith.constant 0.00999999977 : f32
    %6 = vector.broadcast %cst_5 : f32 to vector<8x128xf32>
    %7 = arith.mulf %6, %5 : vector<8x128xf32>
    %8 = arith.maximumf %5, %7 : vector<8x128xf32>
    %c0_6 = arith.constant 0 : index
    %c0_7 = arith.constant 0 : index
    %9 = vector.load %arg4[%c0_6, %c0_7] : memref<128x128xf32, #tpu.memory_space<vmem>>, vector<128x128xf32>
    %c0_8 = arith.constant 0 : index
    %c0_9 = arith.constant 0 : index
    %10 = vector.load %arg5[%c0_8, %c0_9] : memref<1x128xf32, #tpu.memory_space<vmem>>, vector<1x128xf32>
    %cst_10 = arith.constant dense<0.000000e+00> : vector<8x128xf32>
    %11 = tpu.matmul %8, %9, %cst_10 {dimension_numbers = #tpu.dot_dimension_numbers<[1], [0], [0], [1], [0, 0, 1, 1], [], []>} : vector<8x128xf32>, vector<128x128xf32>, vector<8x128xf32> -> vector<8x128xf32>
    %12 = vector.broadcast %10 : vector<1x128xf32> to vector<8x128xf32>
    %13 = arith.addf %11, %12 : vector<8x128xf32>
    %cst_11 = arith.constant 0.00999999977 : f32
    %14 = vector.broadcast %cst_11 : f32 to vector<8x128xf32>
    %15 = arith.mulf %14, %13 : vector<8x128xf32>
    %16 = arith.maximumf %13, %15 : vector<8x128xf32>
    %c0_12 = arith.constant 0 : index
    %c0_13 = arith.constant 0 : index
    %17 = vector.load %arg6[%c0_12, %c0_13] : memref<128x128xf32, #tpu.memory_space<vmem>>, vector<128x128xf32>
    %c0_14 = arith.constant 0 : index
    %c0_15 = arith.constant 0 : index
    %18 = vector.load %arg7[%c0_14, %c0_15] : memref<1x128xf32, #tpu.memory_space<vmem>>, vector<1x128xf32>
    %cst_16 = arith.constant dense<0.000000e+00> : vector<8x128xf32>
    %19 = tpu.matmul %16, %17, %cst_16 {dimension_numbers = #tpu.dot_dimension_numbers<[1], [0], [0], [1], [0, 0, 1, 1], [], []>} : vector<8x128xf32>, vector<128x128xf32>, vector<8x128xf32> -> vector<8x128xf32>
    %20 = vector.broadcast %18 : vector<1x128xf32> to vector<8x128xf32>
    %21 = arith.addf %19, %20 : vector<8x128xf32>
    %22 = math.tanh %21 : vector<8x128xf32>
    %c0_17 = arith.constant 0 : index
    %c0_18 = arith.constant 0 : index
    %23 = vector.load %arg8[%c0_17, %c0_18] : memref<8x128xf32, #tpu.memory_space<vmem>>, vector<8x128xf32>
    tpu.vector_store %arg8[%c0_17, %c0_18], %22 {strides = array<i32>} : memref<8x128xf32, #tpu.memory_space<vmem>>, vector<8x128xf32>,
    return
  }
  func.func @transform_0(%arg0: i32) -> (i32, i32) {
    %c0_i32 = arith.constant 0 : i32
    %c0_i32_0 = arith.constant 0 : i32
    return %arg0, %c0_i32 : i32, i32
  }
  func.func @transform_1(%arg0: i32) -> (i32, i32) {
    %c0_i32 = arith.constant 0 : i32
    %c0_i32_0 = arith.constant 0 : i32
    %c0_i32_1 = arith.constant 0 : i32
    return %c0_i32, %c0_i32_0 : i32, i32
  }
  func.func @transform_2(%arg0: i32) -> (i32, i32) {
    %c0_i32 = arith.constant 0 : i32
    %c0_i32_0 = arith.constant 0 : i32
    %c0_i32_1 = arith.constant 0 : i32
    return %c0_i32, %c0_i32_0 : i32, i32
  }
  func.func @transform_3(%arg0: i32) -> (i32, i32) {
    %c0_i32 = arith.constant 0 : i32
    %c0_i32_0 = arith.constant 0 : i32
    %c0_i32_1 = arith.constant 0 : i32
    return %c0_i32, %c0_i32_0 : i32, i32
  }
  func.func @transform_4(%arg0: i32) -> (i32, i32) {
    %c0_i32 = arith.constant 0 : i32
    %c0_i32_0 = arith.constant 0 : i32
    %c0_i32_1 = arith.constant 0 : i32
    return %c0_i32, %c0_i32_0 : i32, i32
  }
  func.func @transform_5(%arg0: i32) -> (i32, i32) {
    %c0_i32 = arith.constant 0 : i32
    %c0_i32_0 = arith.constant 0 : i32
    %c0_i32_1 = arith.constant 0 : i32
    return %c0_i32, %c0_i32_0 : i32, i32
  }
  func.func @transform_6(%arg0: i32) -> (i32, i32) {
    %c0_i32 = arith.constant 0 : i32
    %c0_i32_0 = arith.constant 0 : i32
    %c0_i32_1 = arith.constant 0 : i32
    return %c0_i32, %c0_i32_0 : i32, i32
  }
  func.func @transform_7(%arg0: i32) -> (i32, i32) {
    %c0_i32 = arith.constant 0 : i32
    %c0_i32_0 = arith.constant 0 : i32
    return %arg0, %c0_i32 : i32, i32
  }
}

</mosaic_0001>

<llo_original>
// kernel: tpu_custom_call.1
$region0: #{tpu_custom_call.1}
  #allocation0 [shape = 'u32[]', space=smem, size = 0x4, offset = 0x4, fixed_abs, tag = 'smem constant byte address 0x4 - core index']
  #allocation1 [shape = 'u32[144,128]{1,0:T(1,128)}', space=vmem, size = 0x12000, scoped, tag = 'internal scratch']
  %s0 = inlined_call_operand.hbm [shape: f32[8,16], index: 0, kind: input, shape index: {}]
  %s1 = inlined_call_operand.hbm [shape: f32[16,128], index: 1, kind: input, shape index: {}]
  %s2 = inlined_call_operand.vmem [shape: f32[1,128], index: 2, kind: input, shape index: {}]
  %s3 = inlined_call_operand.hbm [shape: f32[128,128], index: 3, kind: input, shape index: {}]
  %s4 = inlined_call_operand.vmem [shape: f32[1,128], index: 4, kind: input, shape index: {}]
  %s5 = inlined_call_operand.hbm [shape: f32[128,128], index: 5, kind: input, shape index: {}]
  %s6 = inlined_call_operand.vmem [shape: f32[1,128], index: 6, kind: input, shape index: {}]
  %s7 = inlined_call_operand.hbm [shape: f32[8,128], index: 7, kind: output, shape index: {}]
  %s8 = sld [smem:[#allocation0]]
  $region54: #{tpu_custom_call.1} parent=0
    _
  %s10 = ssub.s32 1, %s8
  %s11 = scalar_select 0, %s10, %s8
  $region1: #{tpu_custom_call.1} parent=0
    #allocation2 [shape = 'u8[4096]{0}', space=vmem, size = 0x1000, scoped, tag = 'input window, operand 0, single buffered']
    #allocation3 [shape = 's32[1]{0}', space=sflag, size = 0x4, scoped, tag = 'scoped memory for tpu_custom_call.1']
    #allocation4 [shape = 's32[1]{0}', space=sflag, size = 0x4, scoped, tag = 'scoped memory for tpu_custom_call.1']
    #allocation5 [shape = 'u8[8192]{0}', space=vmem, size = 0x2000, scoped, tag = 'input window, operand 1, single buffered']
    #allocation6 [shape = 's32[1]{0}', space=sflag, size = 0x4, scoped, tag = 'scoped memory for tpu_custom_call.1']
    #allocation7 [shape = 'u8[65536]{0}', space=vmem, size = 0x10000, scoped, tag = 'input window, operand 3, single buffered']
    #allocation8 [shape = 'u8[65536]{0}', space=vmem, size = 0x10000, scoped, tag = 'input window, operand 5, single buffered']
    #allocation9 [shape = 's32[1]{0}', space=sflag, size = 0x4, scoped, tag = 'scoped memory for tpu_custom_call.1']
    #allocation10 [shape = 'u8[4096]{0}', space=vmem, size = 0x1000, scoped, tag = 'output window, operand 0, single buffered']
    %12 = vsyncpa [#allocation3], 0
    %13 = vsyncpa [#allocation6], 0
    %14 = vsyncpa [#allocation9], 0
    %15 = vsyncpa [#allocation4], 0
    // Predicated region
    $region2: #{tpu_custom_call.1} parent=1 // pred_check
      _
    $region3: #{tpu_custom_call.1} parent=1 // pred_check_branch
      %17 = sbr.rel (0) target = $region5
    $region4: #{tpu_custom_call.1} parent=1 // pred_region
      %s19 = ssub.s32 128, 128
      %20 = vsyncadd [#allocation3], %s19
      %s22 = sshll.u32 [#allocation2], 4
      %s23 = int_to_ptr.vmem [resolvable:$true] %s22
      %25 = dma.hbm_to_vmem [thread:$0]  %s0, 128, %s23, [#allocation3]
    $region5: #{tpu_custom_call.1} parent=1 // pred_fallthru
      _
    // Predicated region
    $region6: #{tpu_custom_call.1} parent=1 // pred_check
      _
    $region7: #{tpu_custom_call.1} parent=1 // pred_check_branch
      %27 = sbr.rel (0) target = $region9
    $region8: #{tpu_custom_call.1} parent=1 // pred_region
      %s29 = ssub.s32 256, 256
      %30 = vsyncadd [#allocation6], %s29
      %s31 = sshll.u32 [#allocation5], 4
      %s32 = int_to_ptr.vmem [resolvable:$true] %s31
      %37 = dma.hbm_to_vmem [thread:$0]  %s1, 256, %s32, [#allocation6], 128, 128, 8
    $region9: #{tpu_custom_call.1} parent=1 // pred_fallthru
      _
    // Predicated region
    $region10: #{tpu_custom_call.1} parent=1 // pred_check
      _
    $region11: #{tpu_custom_call.1} parent=1 // pred_check_branch
      %39 = sbr.rel (0) target = $region13
    $region12: #{tpu_custom_call.1} parent=1 // pred_region
      _
    $region13: #{tpu_custom_call.1} parent=1 // pred_fallthru
      _
    // Predicated region
    $region14: #{tpu_custom_call.1} parent=1 // pred_check
      _
    $region15: #{tpu_custom_call.1} parent=1 // pred_check_branch
      %41 = sbr.rel (0) target = $region17
    $region16: #{tpu_custom_call.1} parent=1 // pred_region
      %s43 = ssub.s32 2048, 2048
      %44 = vsyncadd [#allocation6], %s43
      %s45 = sshll.u32 [#allocation7], 4
      %s46 = int_to_ptr.vmem [resolvable:$true] %s45
      %51 = dma.hbm_to_vmem [thread:$0]  %s3, 2048, %s46, [#allocation6], 128, 128, 8
    $region17: #{tpu_custom_call.1} parent=1 // pred_fallthru
      _
    // Predicated region
    $region18: #{tpu_custom_call.1} parent=1 // pred_check
      _
    $region19: #{tpu_custom_call.1} parent=1 // pred_check_branch
      %53 = sbr.rel (0) target = $region21
    $region20: #{tpu_custom_call.1} parent=1 // pred_region
      _
    $region21: #{tpu_custom_call.1} parent=1 // pred_fallthru
      _
    // Predicated region
    $region22: #{tpu_custom_call.1} parent=1 // pred_check
      _
    $region23: #{tpu_custom_call.1} parent=1 // pred_check_branch
      %55 = sbr.rel (0) target = $region25
    $region24: #{tpu_custom_call.1} parent=1 // pred_region
      %s57 = ssub.s32 2048, 2048
      %58 = vsyncadd [#allocation9], %s57
      %s59 = sshll.u32 [#allocation8], 4
      %s60 = int_to_ptr.vmem [resolvable:$true] %s59
      %65 = dma.hbm_to_vmem [thread:$0]  %s5, 2048, %s60, [#allocation9], 128, 128, 8
    $region25: #{tpu_custom_call.1} parent=1 // pred_fallthru
      _
    // Predicated region
    $region26: #{tpu_custom_call.1} parent=1 // pred_check
      _
    $region27: #{tpu_custom_call.1} parent=1 // pred_check_branch
      %67 = sbr.rel (0) target = $region29
    $region28: #{tpu_custom_call.1} parent=1 // pred_region
      _
    $region29: #{tpu_custom_call.1} parent=1 // pred_fallthru
      _
    // Predicated region
    $region30: #{tpu_custom_call.1} parent=1 // pred_check
      _
    $region31: #{tpu_custom_call.1} parent=1 // pred_check_branch
      %69 = sbr.rel (0) target = $region33
    $region32: #{tpu_custom_call.1} parent=1 // pred_region
      %70 = dma.done [#allocation3], 128
    $region33: #{tpu_custom_call.1} parent=1 // pred_fallthru
      _
    // Predicated region
    $region34: #{tpu_custom_call.1} parent=1 // pred_check
      _
    $region35: #{tpu_custom_call.1} parent=1 // pred_check_branch
      %72 = sbr.rel (0) target = $region37
    $region36: #{tpu_custom_call.1} parent=1 // pred_region
      %73 = dma.done [#allocation6], 256
    $region37: #{tpu_custom_call.1} parent=1 // pred_fallthru
      _
    // Predicated region
    $region38: #{tpu_custom_call.1} parent=1 // pred_check
      _
    $region39: #{tpu_custom_call.1} parent=1 // pred_check_branch
      %75 = sbr.rel (0) target = $region41
    $region40: #{tpu_custom_call.1} parent=1 // pred_region
      %76 = dma.done [#allocation6], 2048
    $region41: #{tpu_custom_call.1} parent=1 // pred_fallthru
      _
    // Predicated region
    $region42: #{tpu_custom_call.1} parent=1 // pred_check
      _
    $region43: #{tpu_custom_call.1} parent=1 // pred_check_branch
      %78 = sbr.rel (0) target = $region45
    $region44: #{tpu_custom_call.1} parent=1 // pred_region
      %79 = dma.done [#allocation9], 2048
    $region45: #{tpu_custom_call.1} parent=1 // pred_fallthru
      _
    %v80 = vld [vmem:[#allocation2] sm:$0xff]
    %v81 = vld [vmem:[#allocation5] sm:$0xff]
    %v82 = vld [vmem:[#allocation5 + $0x8] sm:$0xff]
    %v83 = vld [vmem:[%s2] sm:$0x1]
    %v85 = vlaneseq
    %v86 = vshrl.u32 %v85, 7
    %v87 = vsub.s32 0, %v86
    %v88 = vrot.slane %v83, %v87
    %vm90 = vcmask 130048
    %v92 = vsel %vm90, %v80, 0
    %94 = vmatprep.subr.mxu0 0.0
    %95 = vmatpush1.msra.mxu0 %v81
    %96 = vmatprep.subr.mxu0 0.0
    %97 = vmatpush1.msra.mxu0 %v82
    %98 = vmatprep.subr.mxu0 0.0
    %99 = vmatpush1.msra.mxu0 0.0
    %100 = vmatprep.subr.mxu0 0.0
    %101 = vmatpush1.msra.mxu0 0.0
    %102 = vmatprep.subr.mxu0 0.0
    %103 = vmatpush1.msra.mxu0 0.0
    %104 = vmatprep.subr.mxu0 0.0
    %105 = vmatpush1.msra.mxu0 0.0
    %106 = vmatprep.subr.mxu0 0.0
    %107 = vmatpush1.msra.mxu0 0.0
    %108 = vmatprep.subr.mxu0 0.0
    %109 = vmatpush1.msra.mxu0 0.0
    %110 = vmatprep.subr.mxu0 0.0
    %111 = vmatpush1.msra.mxu0 0.0
    %112 = vmatprep.subr.mxu0 0.0
    %113 = vmatpush1.msra.mxu0 0.0
    %114 = vmatprep.subr.mxu0 0.0
    %115 = vmatpush1.msra.mxu0 0.0
    %116 = vmatprep.subr.mxu0 0.0
    %117 = vmatpush1.msra.mxu0 0.0
    %118 = vmatprep.subr.mxu0 0.0
    %119 = vmatpush1.msra.mxu0 0.0
    %120 = vmatprep.subr.mxu0 0.0
    %121 = vmatpush1.msra.mxu0 0.0
    %122 = vmatprep.subr.mxu0 0.0
    %123 = vmatpush1.msra.mxu0 0.0
    %124 = vmatprep.subr.mxu0 0.0
    %125 = vmatpush1.msra.mxu0 0.0
    %126 = vmatprep.subr.mxu0 0.0
    %127 = vmatpush1.msra.mxu0 0.0
    %128 = vmatprep.subr.mxu0 0.0
    %129 = vmatpush1.msra.mxu0 0.0
    %130 = vmatprep.subr.mxu0 0.0
    %131 = vmatpush1.msra.mxu0 0.0
    %132 = vmatprep.subr.mxu0 0.0
    %133 = vmatpush1.msra.mxu0 0.0
    %134 = vmatprep.subr.mxu0 0.0
    %135 = vmatpush1.msra.mxu0 0.0
    %136 = vmatprep.subr.mxu0 0.0
    %137 = vmatpush1.msra.mxu0 0.0
    %138 = vmatprep.subr.mxu0 0.0
    %139 = vmatpush1.msra.mxu0 0.0
    %140 = vmatprep.subr.mxu0 0.0
    %141 = vmatpush1.msra.mxu0 0.0
    %142 = vmatprep.subr.mxu0 0.0
    %143 = vmatpush1.msra.mxu0 0.0
    %144 = vmatprep.subr.mxu0 0.0
    %145 = vmatpush1.msra.mxu0 0.0
    %146 = vmatprep.subr.mxu0 0.0
    %147 = vmatpush1.msra.mxu0 0.0
    %148 = vmatprep.subr.mxu0 0.0
    %149 = vmatpush1.msra.mxu0 0.0
    %150 = vmatprep.subr.mxu0 0.0
    %151 = vmatpush1.msra.mxu0 0.0
    %152 = vmatprep.subr.mxu0 0.0
    %153 = vmatpush1.msra.mxu0 0.0
    %154 = vmatprep.subr.mxu0 0.0
    %155 = vmatpush1.msra.mxu0 0.0
    %156 = vmatprep.subr.mxu0 0.0
    %157 = vmatpush1.msra.mxu0 0.0
    %158 = vmatprep.mubr.f32.mxu0 0.0
    %159 = vmatmul.mubr.f32.gmra.mrb[0].mxu0 %v92
    %v160 = vpop.f32.mrb[0].mxu0
    %v161 = vadd.f32 %v88, %v160
    %v162 = vpop.f32.mrb[0].mxu0
    %163 = vdwg.mxu0
    %v164 = vmul.f32 %v161, 0.01
    %v165 = vmax.f32 %v161, %v164
    %v166 = vld [vmem:[#allocation7] sm:$0xff]
    %v167 = vld [vmem:[#allocation7 + $0x8] sm:$0xff]
    %v168 = vld [vmem:[#allocation7 + $0x10] sm:$0xff]
    %v169 = vld [vmem:[#allocation7 + $0x18] sm:$0xff]
    %v170 = vld [vmem:[#allocation7 + $0x20] sm:$0xff]
    %v171 = vld [vmem:[#allocation7 + $0x28] sm:$0xff]
    %v172 = vld [vmem:[#allocation7 + $0x30] sm:$0xff]
    %v173 = vld [vmem:[#allocation7 + $0x38] sm:$0xff]
    %v174 = vld [vmem:[#allocation7 + $0x40] sm:$0xff]
    %v175 = vld [vmem:[#allocation7 + $0x48] sm:$0xff]
    %v176 = vld [vmem:[#allocation7 + $0x50] sm:$0xff]
    %v177 = vld [vmem:[#allocation7 + $0x58] sm:$0xff]
    %v178 = vld [vmem:[#allocation7 + $0x60] sm:$0xff]
    %v179 = vld [vmem:[#allocation7 + $0x68] sm:$0xff]
    %v180 = vld [vmem:[#allocation7 + $0x70] sm:$0xff]
    %v181 = vld [vmem:[#allocation7 + $0x78] sm:$0xff]
    %v182 = vld [vmem:[%s4] sm:$0x1]
    %v184 = vlaneseq
    %v185 = vshrl.u32 %v184, 7
    %v186 = vsub.s32 0, %v185
    %v187 = vrot.slane %v182, %v186
    %189 = vmatprep.subr.mxu0 0.0
    %190 = vmatpush1.msra.mxu0 %v166
    %191 = vmatprep.subr.mxu0 0.0
    %192 = vmatpush1.msra.mxu0 %v167
    %193 = vmatprep.subr.mxu0 0.0
    %194 = vmatpush1.msra.mxu0 %v168
    %195 = vmatprep.subr.mxu0 0.0
    %196 = vmatpush1.msra.mxu0 %v169
    %197 = vmatprep.subr.mxu0 0.0
    %198 = vmatpush1.msra.mxu0 %v170
    %199 = vmatprep.subr.mxu0 0.0
    %200 = vmatpush1.msra.mxu0 %v171
    %201 = vmatprep.subr.mxu0 0.0
    %202 = vmatpush1.msra.mxu0 %v172
    %203 = vmatprep.subr.mxu0 0.0
    %204 = vmatpush1.msra.mxu0 %v173
    %205 = vmatprep.subr.mxu0 0.0
    %206 = vmatpush1.msra.mxu0 %v174
    %207 = vmatprep.subr.mxu0 0.0
    %208 = vmatpush1.msra.mxu0 %v175
    %209 = vmatprep.subr.mxu0 0.0
    %210 = vmatpush1.msra.mxu0 %v176
    %211 = vmatprep.subr.mxu0 0.0
    %212 = vmatpush1.msra.mxu0 %v177
    %213 = vmatprep.subr.mxu0 0.0
    %214 = vmatpush1.msra.mxu0 %v178
    %215 = vmatprep.subr.mxu0 0.0
    %216 = vmatpush1.msra.mxu0 %v179
    %217 = vmatprep.subr.mxu0 0.0
    %218 = vmatpush1.msra.mxu0 %v180
    %219 = vmatprep.subr.mxu0 0.0
    %220 = vmatpush1.msra.mxu0 %v181
    %221 = vmatprep.subr.mxu0 0.0
    %222 = vmatpush1.msra.mxu0 0.0
    %223 = vmatprep.subr.mxu0 0.0
    %224 = vmatpush1.msra.mxu0 0.0
    %225 = vmatprep.subr.mxu0 0.0
    %226 = vmatpush1.msra.mxu0 0.0
    %227 = vmatprep.subr.mxu0 0.0
    %228 = vmatpush1.msra.mxu0 0.0
    %229 = vmatprep.subr.mxu0 0.0
    %230 = vmatpush1.msra.mxu0 0.0
    %231 = vmatprep.subr.mxu0 0.0
    %232 = vmatpush1.msra.mxu0 0.0
    %233 = vmatprep.subr.mxu0 0.0
    %234 = vmatpush1.msra.mxu0 0.0
    %235 = vmatprep.subr.mxu0 0.0
    %236 = vmatpush1.msra.mxu0 0.0
    %237 = vmatprep.subr.mxu0 0.0
    %238 = vmatpush1.msra.mxu0 0.0
    %239 = vmatprep.subr.mxu0 0.0
    %240 = vmatpush1.msra.mxu0 0.0
    %241 = vmatprep.subr.mxu0 0.0
    %242 = vmatpush1.msra.mxu0 0.0
    %243 = vmatprep.subr.mxu0 0.0
    %244 = vmatpush1.msra.mxu0 0.0
    %245 = vmatprep.subr.mxu0 0.0
    %246 = vmatpush1.msra.mxu0 0.0
    %247 = vmatprep.subr.mxu0 0.0
    %248 = vmatpush1.msra.mxu0 0.0
    %249 = vmatprep.subr.mxu0 0.0
    %250 = vmatpush1.msra.mxu0 0.0
    %251 = vmatprep.subr.mxu0 0.0
    %252 = vmatpush1.msra.mxu0 0.0
    %253 = vmatprep.mubr.f32.mxu0 0.0
    %254 = vmatmul.mubr.f32.gmra.mrb[0].mxu0 %v165
    %v255 = vpop.f32.mrb[0].mxu0
    %v256 = vadd.f32 %v187, %v255
    %v257 = vpop.f32.mrb[0].mxu0
    %258 = vdwg.mxu0
    %v259 = vmul.f32 %v256, 0.01
    %v260 = vmax.f32 %v256, %v259
    %v261 = vld [vmem:[#allocation8] sm:$0xff]
    %v262 = vld [vmem:[#allocation8 + $0x8] sm:$0xff]
    %v263 = vld [vmem:[#allocation8 + $0x10] sm:$0xff]
    %v264 = vld [vmem:[#allocation8 + $0x18] sm:$0xff]
    %v265 = vld [vmem:[#allocation8 + $0x20] sm:$0xff]
    %v266 = vld [vmem:[#allocation8 + $0x28] sm:$0xff]
    %v267 = vld [vmem:[#allocation8 + $0x30] sm:$0xff]
    %v268 = vld [vmem:[#allocation8 + $0x38] sm:$0xff]
    %v269 = vld [vmem:[#allocation8 + $0x40] sm:$0xff]
    %v270 = vld [vmem:[#allocation8 + $0x48] sm:$0xff]
    %v271 = vld [vmem:[#allocation8 + $0x50] sm:$0xff]
    %v272 = vld [vmem:[#allocation8 + $0x58] sm:$0xff]
    %v273 = vld [vmem:[#allocation8 + $0x60] sm:$0xff]
    %v274 = vld [vmem:[#allocation8 + $0x68] sm:$0xff]
    %v275 = vld [vmem:[#allocation8 + $0x70] sm:$0xff]
    %v276 = vld [vmem:[#allocation8 + $0x78] sm:$0xff]
    %v277 = vld [vmem:[%s6] sm:$0x1]
    %v279 = vlaneseq
    %v280 = vshrl.u32 %v279, 7
    %v281 = vsub.s32 0, %v280
    %v282 = vrot.slane %v277, %v281
    %284 = vmatprep.subr.mxu0 0.0
    %285 = vmatpush1.msra.mxu0 %v261
    %286 = vmatprep.subr.mxu0 0.0
    %287 = vmatpush1.msra.mxu0 %v262
    %288 = vmatprep.subr.mxu0 0.0
    %289 = vmatpush1.msra.mxu0 %v263
    %290 = vmatprep.subr.mxu0 0.0
    %291 = vmatpush1.msra.mxu0 %v264
    %292 = vmatprep.subr.mxu0 0.0
    %293 = vmatpush1.msra.mxu0 %v265
    %294 = vmatprep.subr.mxu0 0.0
    %295 = vmatpush1.msra.mxu0 %v266
    %296 = vmatprep.subr.mxu0 0.0
    %297 = vmatpush1.msra.mxu0 %v267
    %298 = vmatprep.subr.mxu0 0.0
    %299 = vmatpush1.msra.mxu0 %v268
    %300 = vmatprep.subr.mxu0 0.0
    %301 = vmatpush1.msra.mxu0 %v269
    %302 = vmatprep.subr.mxu0 0.0
    %303 = vmatpush1.msra.mxu0 %v270
    %304 = vmatprep.subr.mxu0 0.0
    %305 = vmatpush1.msra.mxu0 %v271
    %306 = vmatprep.subr.mxu0 0.0
    %307 = vmatpush1.msra.mxu0 %v272
    %308 = vmatprep.subr.mxu0 0.0
    %309 = vmatpush1.msra.mxu0 %v273
    %310 = vmatprep.subr.mxu0 0.0
    %311 = vmatpush1.msra.mxu0 %v274
    %312 = vmatprep.subr.mxu0 0.0
    %313 = vmatpush1.msra.mxu0 %v275
    %314 = vmatprep.subr.mxu0 0.0
    %315 = vmatpush1.msra.mxu0 %v276
    %316 = vmatprep.subr.mxu0 0.0
    %317 = vmatpush1.msra.mxu0 0.0
    %318 = vmatprep.subr.mxu0 0.0
    %319 = vmatpush1.msra.mxu0 0.0
    %320 = vmatprep.subr.mxu0 0.0
    %321 = vmatpush1.msra.mxu0 0.0
    %322 = vmatprep.subr.mxu0 0.0
    %323 = vmatpush1.msra.mxu0 0.0
    %324 = vmatprep.subr.mxu0 0.0
    %325 = vmatpush1.msra.mxu0 0.0
    %326 = vmatprep.subr.mxu0 0.0
    %327 = vmatpush1.msra.mxu0 0.0
    %328 = vmatprep.subr.mxu0 0.0
    %329 = vmatpush1.msra.mxu0 0.0
    %330 = vmatprep.subr.mxu0 0.0
    %331 = vmatpush1.msra.mxu0 0.0
    %332 = vmatprep.subr.mxu0 0.0
    %333 = vmatpush1.msra.mxu0 0.0
    %334 = vmatprep.subr.mxu0 0.0
    %335 = vmatpush1.msra.mxu0 0.0
    %336 = vmatprep.subr.mxu0 0.0
    %337 = vmatpush1.msra.mxu0 0.0
    %338 = vmatprep.subr.mxu0 0.0
    %339 = vmatpush1.msra.mxu0 0.0
    %340 = vmatprep.subr.mxu0 0.0
    %341 = vmatpush1.msra.mxu0 0.0
    %342 = vmatprep.subr.mxu0 0.0
    %343 = vmatpush1.msra.mxu0 0.0
    %344 = vmatprep.subr.mxu0 0.0
    %345 = vmatpush1.msra.mxu0 0.0
    %346 = vmatprep.subr.mxu0 0.0
    %347 = vmatpush1.msra.mxu0 0.0
    %348 = vmatprep.mubr.f32.mxu0 0.0
    %349 = vmatmul.mubr.f32.gmra.mrb[0].mxu0 %v260
    %v350 = vpop.f32.mrb[0].mxu0
    %v351 = vadd.f32 %v282, %v350
    %v352 = vpop.f32.mrb[0].mxu0
    %353 = vdwg.mxu0
    %v354 = vtanh.pop %v351
    %355 = vst [vmem:[#allocation10] sm:$0xff] %v354
    // Predicated region
    $region46: #{tpu_custom_call.1} parent=1 // pred_check
      _
    $region47: #{tpu_custom_call.1} parent=1 // pred_check_branch
      %357 = sbr.rel (0) target = $region49
    $region48: #{tpu_custom_call.1} parent=1 // pred_region
      %s359 = ssub.s32 128, 128
      %360 = vsyncadd [#allocation4], %s359
      %s362 = sshll.u32 [#allocation10], 4
      %s363 = int_to_ptr.vmem [resolvable:$true] %s362
      %365 = dma.vmem_to_hbm [thread:$0]  %s363, 128, %s7, [#allocation4]
    $region49: #{tpu_custom_call.1} parent=1 // pred_fallthru
      _
    // Predicated region
    $region50: #{tpu_custom_call.1} parent=1 // pred_check
      _
    $region51: #{tpu_custom_call.1} parent=1 // pred_check_branch
      %367 = sbr.rel (0) target = $region53
    $region52: #{tpu_custom_call.1} parent=1 // pred_region
      %368 = dma.done [#allocation4], 128
    $region53: #{tpu_custom_call.1} parent=1 // pred_fallthru
      _
    %369 = vsyncpa [#allocation3], 1
    %370 = vsyncpa [#allocation6], 1
    %371 = vsyncpa [#allocation9], 1
    %372 = vsyncpa [#allocation4], 1

</llo_original>
